<compile_context>
chip_gen: v7x
topology: tpu7x:2x2x1
jax: 0.10.0
libtpu: 0.0.40
codegen_flags: <defaults>
</compile_context>

<pallas_src>
import numpy as np
import jax
import jax.numpy as jnp
from jax.experimental import pallas as pl
from jax.experimental.pallas import tpu as pltpu

# ---------------------------------------------------------------------------
# Module constants (from BALSA.__init__).
A1 = 1.0
A2 = 1.0
B1 = 0.2
B2 = 0.2
K = 1.1
N = 2
S = 0.5
SCALE = 10.0
P = 20.0

assert N == 2, "kernel hardcodes the Hill exponent n=2 (z^n computed as z*z)"

SN = S ** N                       # s^n
INV_SCALE = 1.0 / SCALE
K_OVER_SCALE = K / SCALE
INV_2P = 1.0 / (2.0 * P)
C = 0.62562059 * SCALE            # CBF equilibrium target (scaled)

SUB = 8
LANES = 128
ROWS_PER_BLOCK = 512              # (512,128) f32 block = 256 KiB per buffer


def _rcp(d):
    """Reciprocal of a strictly-positive f32 array.

    EUP approximate reciprocal (free bundle slot) + two Newton-Raphson steps,
    which brings even a bf16-accurate seed to fp32 accuracy.  Cheaper on the
    VALU than a full-precision divide; sign/branch decisions never feed
    through it.
    """
    r = pl.reciprocal(d, approx=True)
    r = r * (2.0 - d * r)
    r = r * (2.0 - d * r)
    return r


def _balsa_kernel(x_ref, y_ref, ex_ref, ey_ref,
                  dx_ref, dy_ref, dex_ref, dey_ref):
    x = x_ref[...]
    y = y_ref[...]
    ex = ex_ref[...]
    ey = ey_ref[...]

    # ---- QP input: measured state (x + e_x, y + e_y) ----------------------
    xi = x + ex
    yi = y + ey
    txi = xi * INV_SCALE
    tyi = yi * INV_SCALE
    xin = txi * txi                       # (xi/scale)^2
    yin = tyi * tyi
    inv_dxi = _rcp(SN + xin)              # shared by hx_i and ry_i
    inv_dyi = _rcp(SN + yin)              # shared by hy_i and rx_i
    hx_i = xin * inv_dxi
    hy_i = yin * inv_dyi
    rx_i = SN * inv_dyi
    ry_i = SN * inv_dxi

    fx = A1 * hx_i + B1 * rx_i - K_OVER_SCALE * xi     # GRN drift (x comp)
    fy = A2 * hy_i + B2 * ry_i - K_OVER_SCALE * yi     # GRN drift (y comp)

    # Constraint row G = [g1, -1], rhs h1 (cvxopt QP data, elementwise).
    dxc = xi - C
    dyc = yi - C
    g1 = SCALE * dxc * hx_i
    h1 = -(dxc * SCALE) * fx - (dyc * SCALE) * fy - 0.5 * (dxc * dxc + dyc * dyc)

    # Closed-form solution of  min 0.5*u1^2 + p*u2^2  s.t. g1*u1 - u2 <= h1:
    #   inactive (h1 >= 0): u1 = 0 ; active: u1 = h1*g1 / (g1^2 + 1/(2p)).
    # lam_den >= 1/(2p) > 0 always, so the reciprocal is safe in both branches.
    lam_den = g1 * g1 + INV_2P
    u1 = jnp.where(h1 < 0.0, h1 * g1, 0.0) * _rcp(lam_den)

    # ---- controlled GRN dynamics on the raw state (x, y) -------------------
    tx = x * INV_SCALE
    ty = y * INV_SCALE
    xn = tx * tx
    yn = ty * ty
    inv_dx = _rcp(SN + xn)
    inv_dy = _rcp(SN + yn)
    hx = xn * inv_dx
    hy = yn * inv_dy
    rx = SN * inv_dy
    ry = SN * inv_dx

    dx = SCALE * (A1 * hx + B1 * rx - K_OVER_SCALE * x + u1 * hx)
    dy = SCALE * (A2 * hy + B2 * ry - K_OVER_SCALE * y)
    dx_ref[...] = dx
    dy_ref[...] = dy
    dex_ref[...] = -dx
    dey_ref[...] = -dy


def _round_up(a, b):
    return (a + b - 1) // b * b


def balsa_forward(x, y, e_x, e_y):
    """Pallas equivalent of BALSA.forward(t, (x, y, e_x, e_y)).

    Accepts arbitrary equally-shaped float arrays; each element is an
    independent trajectory. Returns (dx, dy, -dx, -dy) with the input shape.
    """
    orig_shape = jnp.shape(x)
    flat = [jnp.asarray(a, jnp.float32).reshape(-1) for a in (x, y, e_x, e_y)]
    B = flat[0].shape[0]

    rows_needed = max(1, -(-B // LANES))
    if rows_needed <= ROWS_PER_BLOCK:
        # Small / medium batch: single grid-less call, everything in VMEM.
        rows = _round_up(rows_needed, SUB)
        nb = 1
    else:
        # Large batch: big (512,128) blocks -> grid has >= 2 steps, so the
        # 'parallel' axis also feeds both v7x TensorCores.
        nb = -(-rows_needed // ROWS_PER_BLOCK)
        rows = nb * ROWS_PER_BLOCK

    pad = rows * LANES - B

    def prep(a):
        if pad:
            a = jnp.pad(a, (0, pad))        # no-op for lane/block aligned B
        return a.reshape(rows, LANES)

    ins = [prep(a) for a in flat]
    out_sds = tuple(jax.ShapeDtypeStruct((rows, LANES), jnp.float32)
                    for _ in range(4))

    if nb == 1:
        outs = pl.pallas_call(_balsa_kernel, out_shape=out_sds)(*ins)
    else:
        in_specs = tuple(pl.BlockSpec((ROWS_PER_BLOCK, LANES), lambda i: (i, 0))
                         for _ in range(4))
        out_specs = tuple(pl.BlockSpec((ROWS_PER_BLOCK, LANES), lambda i: (i, 0))
                          for _ in range(4))
        outs = pl.pallas_call(
            _balsa_kernel,
            grid=(nb,),
            in_specs=in_specs,
            out_specs=out_specs,
            out_shape=out_sds,
            compiler_params=pltpu.CompilerParams(
                dimension_semantics=("parallel",)),
        )(*ins)

    def post(o):
        return o.reshape(-1)[:B].reshape(orig_shape)

    dx, dy, dex, dey = (post(o) for o in outs)
    return dx, dy, dex, dey


# ---------------------------------------------------------------------------
# Float64 NumPy reference (original module formulas + exact QP closed form).
def _reference_np(x, y, ex, ey):
    x = np.asarray(x, np.float64); y = np.asarray(y, np.float64)
    ex = np.asarray(ex, np.float64); ey = np.asarray(ey, np.float64)
    sn = S ** N
    c = 0.62562059 * SCALE
    xi, yi = x + ex, y + ey
    xin, yin = (xi / SCALE) ** N, (yi / SCALE) ** N
    hx_i, hy_i = xin / (sn + xin), yin / (sn + yin)
    fx = A1 * hx_i + B1 * sn / (sn + yin) - K * xi / SCALE
    fy = A2 * hy_i + B2 * sn / (sn + xin) - K * yi / SCALE
    g1 = SCALE * (xi - c) * hx_i
    h1 = (-(xi - c) * SCALE * fx - (yi - c) * SCALE * fy
          - ((xi - c) ** 2 + (yi - c) ** 2) / 2.0)
    u1 = np.where(h1 >= 0.0, 0.0, h1 * g1 / (g1 * g1 + 1.0 / (2.0 * P)))
    xn, yn = (x / SCALE) ** N, (y / SCALE) ** N
    hx, hy = xn / (sn + xn), yn / (sn + yn)
    dx = SCALE * (A1 * hx + B1 * sn / (sn + yn) - K * x / SCALE + u1 * hx)
    dy = SCALE * (A2 * hy + B2 * sn / (sn + xn) - K * y / SCALE)
    return dx, dy, -dx, -dy


def _check(shape, seed):
    key = jax.random.PRNGKey(seed)
    kx, ky, kex, key2 = jax.random.split(key, 4)
    x = jax.random.uniform(kx, shape, jnp.float32, 0.1, 10.0)
    y = jax.random.uniform(ky, shape, jnp.float32, 0.1, 10.0)
    e_x = 0.05 * jax.random.normal(kex, shape, jnp.float32)
    e_y = 0.05 * jax.random.normal(key2, shape, jnp.float32)

    outs = jax.block_until_ready(balsa_forward(x, y, e_x, e_y))
    refs = _reference_np(np.asarray(x), np.asarray(y),
                         np.asarray(e_x), np.asarray(e_y))
    for o, r in zip(outs, refs):
        o = np.asarray(o, np.float64)
        assert o.shape == r.shape
        err = np.abs(o - r)
        # Tolerance: fp32 ulps are amplified by up to ~2*p*scale*|h1|*H ~ 4e3
        # near the QP active-set boundary -> worst-case ~1e-2 absolute even
        # for a correct fp32 kernel; typical error stays ~1e-5 (median check).
        tol = 5e-2 + 2e-3 * np.abs(r)
        assert np.all(err <= tol), float(err.max())
        assert float(np.median(err)) < 1e-3, float(np.median(err))


if __name__ == "__main__":
    # Matches the module's (1,)-shaped state usage, batched over 8
    # independent trajectories (single-vreg, grid-less path).
    _check((1, 8), seed=0)
    # Medium trajectory batch (grid-less path, several sublane rows).
    _check((1, 1500), seed=0)
    # Large trajectory batch exercising the tiled 'parallel' grid path
    # (two (512,128) blocks per array).
    _check((70000,), seed=0)
    print("KERNEL_OK")
</pallas_src>

<mosaic_0001>
module attributes {stable_mosaic.version = 11 : i64} {
  func.func @_balsa_kernel(%arg0: memref<8x128xf32, #tpu.memory_space<vmem>>, %arg1: memref<8x128xf32, #tpu.memory_space<vmem>>, %arg2: memref<8x128xf32, #tpu.memory_space<vmem>>, %arg3: memref<8x128xf32, #tpu.memory_space<vmem>>, %arg4: memref<8x128xf32, #tpu.memory_space<vmem>>, %arg5: memref<8x128xf32, #tpu.memory_space<vmem>>, %arg6: memref<8x128xf32, #tpu.memory_space<vmem>>, %arg7: memref<8x128xf32, #tpu.memory_space<vmem>>) attributes {dimension_semantics = [], scalar_prefetch = 0 : i64, scratch_operands = 0 : i64, tpu.core_type = #tpu.core_type<tc>} {
    %c0 = arith.constant 0 : index
    %c0_0 = arith.constant 0 : index
    %0 = vector.load %arg0[%c0, %c0_0] : memref<8x128xf32, #tpu.memory_space<vmem>>, vector<8x128xf32>
    %c0_1 = arith.constant 0 : index
    %c0_2 = arith.constant 0 : index
    %1 = vector.load %arg1[%c0_1, %c0_2] : memref<8x128xf32, #tpu.memory_space<vmem>>, vector<8x128xf32>
    %c0_3 = arith.constant 0 : index
    %c0_4 = arith.constant 0 : index
    %2 = vector.load %arg2[%c0_3, %c0_4] : memref<8x128xf32, #tpu.memory_space<vmem>>, vector<8x128xf32>
    %c0_5 = arith.constant 0 : index
    %c0_6 = arith.constant 0 : index
    %3 = vector.load %arg3[%c0_5, %c0_6] : memref<8x128xf32, #tpu.memory_space<vmem>>, vector<8x128xf32>
    %4 = arith.addf %0, %2 : vector<8x128xf32>
    %5 = arith.addf %1, %3 : vector<8x128xf32>
    %cst = arith.constant 1.000000e-01 : f32
    %6 = vector.broadcast %cst : f32 to vector<8x128xf32>
    %7 = arith.mulf %4, %6 : vector<8x128xf32>
    %cst_7 = arith.constant 1.000000e-01 : f32
    %8 = vector.broadcast %cst_7 : f32 to vector<8x128xf32>
    %9 = arith.mulf %5, %8 : vector<8x128xf32>
    %10 = arith.mulf %7, %7 : vector<8x128xf32>
    %11 = arith.mulf %9, %9 : vector<8x128xf32>
    %cst_8 = arith.constant 2.500000e-01 : f32
    %12 = vector.broadcast %cst_8 : f32 to vector<8x128xf32>
    %13 = arith.addf %12, %10 : vector<8x128xf32>
    %14 = tpu.reciprocal %13 {approx = true} : vector<8x128xf32> -> vector<8x128xf32>
    %15 = arith.mulf %13, %14 : vector<8x128xf32>
    %cst_9 = arith.constant 2.000000e+00 : f32
    %16 = vector.broadcast %cst_9 : f32 to vector<8x128xf32>
    %17 = arith.subf %16, %15 : vector<8x128xf32>
    %18 = arith.mulf %14, %17 : vector<8x128xf32>
    %19 = arith.mulf %13, %18 : vector<8x128xf32>
    %cst_10 = arith.constant 2.000000e+00 : f32
    %20 = vector.broadcast %cst_10 : f32 to vector<8x128xf32>
    %21 = arith.subf %20, %19 : vector<8x128xf32>
    %22 = arith.mulf %18, %21 : vector<8x128xf32>
    %cst_11 = arith.constant 2.500000e-01 : f32
    %23 = vector.broadcast %cst_11 : f32 to vector<8x128xf32>
    %24 = arith.addf %23, %11 : vector<8x128xf32>
    %25 = tpu.reciprocal %24 {approx = true} : vector<8x128xf32> -> vector<8x128xf32>
    %26 = arith.mulf %24, %25 : vector<8x128xf32>
    %cst_12 = arith.constant 2.000000e+00 : f32
    %27 = vector.broadcast %cst_12 : f32 to vector<8x128xf32>
    %28 = arith.subf %27, %26 : vector<8x128xf32>
    %29 = arith.mulf %25, %28 : vector<8x128xf32>
    %30 = arith.mulf %24, %29 : vector<8x128xf32>
    %cst_13 = arith.constant 2.000000e+00 : f32
    %31 = vector.broadcast %cst_13 : f32 to vector<8x128xf32>
    %32 = arith.subf %31, %30 : vector<8x128xf32>
    %33 = arith.mulf %29, %32 : vector<8x128xf32>
    %34 = arith.mulf %10, %22 : vector<8x128xf32>
    %35 = arith.mulf %11, %33 : vector<8x128xf32>
    %cst_14 = arith.constant 2.500000e-01 : f32
    %36 = vector.broadcast %cst_14 : f32 to vector<8x128xf32>
    %37 = arith.mulf %36, %33 : vector<8x128xf32>
    %cst_15 = arith.constant 2.500000e-01 : f32
    %38 = vector.broadcast %cst_15 : f32 to vector<8x128xf32>
    %39 = arith.mulf %38, %22 : vector<8x128xf32>
    %cst_16 = arith.constant 1.000000e+00 : f32
    %40 = vector.broadcast %cst_16 : f32 to vector<8x128xf32>
    %41 = arith.mulf %40, %34 : vector<8x128xf32>
    %cst_17 = arith.constant 2.000000e-01 : f32
    %42 = vector.broadcast %cst_17 : f32 to vector<8x128xf32>
    %43 = arith.mulf %42, %37 : vector<8x128xf32>
    %44 = arith.addf %41, %43 : vector<8x128xf32>
    %cst_18 = arith.constant 1.100000e-01 : f32
    %45 = vector.broadcast %cst_18 : f32 to vector<8x128xf32>
    %46 = arith.mulf %45, %4 : vector<8x128xf32>
    %47 = arith.subf %44, %46 : vector<8x128xf32>
    %cst_19 = arith.constant 1.000000e+00 : f32
    %48 = vector.broadcast %cst_19 : f32 to vector<8x128xf32>
    %49 = arith.mulf %48, %35 : vector<8x128xf32>
    %cst_20 = arith.constant 2.000000e-01 : f32
    %50 = vector.broadcast %cst_20 : f32 to vector<8x128xf32>
    %51 = arith.mulf %50, %39 : vector<8x128xf32>
    %52 = arith.addf %49, %51 : vector<8x128xf32>
    %cst_21 = arith.constant 1.100000e-01 : f32
    %53 = vector.broadcast %cst_21 : f32 to vector<8x128xf32>
    %54 = arith.mulf %53, %5 : vector<8x128xf32>
    %55 = arith.subf %52, %54 : vector<8x128xf32>
    %cst_22 = arith.constant 6.25620604 : f32
    %56 = vector.broadcast %cst_22 : f32 to vector<8x128xf32>
    %57 = arith.subf %4, %56 : vector<8x128xf32>
    %cst_23 = arith.constant 6.25620604 : f32
    %58 = vector.broadcast %cst_23 : f32 to vector<8x128xf32>
    %59 = arith.subf %5, %58 : vector<8x128xf32>
    %cst_24 = arith.constant 1.000000e+01 : f32
    %60 = vector.broadcast %cst_24 : f32 to vector<8x128xf32>
    %61 = arith.mulf %60, %57 : vector<8x128xf32>
    %62 = arith.mulf %61, %34 : vector<8x128xf32>
    %cst_25 = arith.constant 1.000000e+01 : f32
    %63 = vector.broadcast %cst_25 : f32 to vector<8x128xf32>
    %64 = arith.mulf %57, %63 : vector<8x128xf32>
    %cst_26 = arith.constant 0.000000e+00 : f32
    %65 = vector.broadcast %cst_26 : f32 to vector<8x128xf32>
    %66 = arith.subf %65, %64 : vector<8x128xf32>
    %67 = arith.mulf %66, %47 : vector<8x128xf32>
    %cst_27 = arith.constant 1.000000e+01 : f32
    %68 = vector.broadcast %cst_27 : f32 to vector<8x128xf32>
    %69 = arith.mulf %59, %68 : vector<8x128xf32>
    %70 = arith.mulf %69, %55 : vector<8x128xf32>
    %71 = arith.subf %67, %70 : vector<8x128xf32>
    %72 = arith.mulf %57, %57 : vector<8x128xf32>
    %73 = arith.mulf %59, %59 : vector<8x128xf32>
    %74 = arith.addf %72, %73 : vector<8x128xf32>
    %cst_28 = arith.constant 5.000000e-01 : f32
    %75 = vector.broadcast %cst_28 : f32 to vector<8x128xf32>
    %76 = arith.mulf %75, %74 : vector<8x128xf32>
    %77 = arith.subf %71, %76 : vector<8x128xf32>
    %78 = arith.mulf %62, %62 : vector<8x128xf32>
    %cst_29 = arith.constant 2.500000e-02 : f32
    %79 = vector.broadcast %cst_29 : f32 to vector<8x128xf32>
    %80 = arith.addf %78, %79 : vector<8x128xf32>
    %cst_30 = arith.constant 0.000000e+00 : f32
    %81 = vector.broadcast %cst_30 : f32 to vector<8x128xf32>
    %82 = arith.cmpf olt, %77, %81 : vector<8x128xf32>
    %83 = arith.mulf %77, %62 : vector<8x128xf32>
    %cst_31 = arith.constant 0.000000e+00 : f32
    %84 = vector.broadcast %cst_31 : f32 to vector<8x128xf32>
    %85 = arith.select %82, %83, %84 : vector<8x128xi1>, vector<8x128xf32>
    %86 = tpu.reciprocal %80 {approx = true} : vector<8x128xf32> -> vector<8x128xf32>
    %87 = arith.mulf %80, %86 : vector<8x128xf32>
    %cst_32 = arith.constant 2.000000e+00 : f32
    %88 = vector.broadcast %cst_32 : f32 to vector<8x128xf32>
    %89 = arith.subf %88, %87 : vector<8x128xf32>
    %90 = arith.mulf %86, %89 : vector<8x128xf32>
    %91 = arith.mulf %80, %90 : vector<8x128xf32>
    %cst_33 = arith.constant 2.000000e+00 : f32
    %92 = vector.broadcast %cst_33 : f32 to vector<8x128xf32>
    %93 = arith.subf %92, %91 : vector<8x128xf32>
    %94 = arith.mulf %90, %93 : vector<8x128xf32>
    %95 = arith.mulf %85, %94 : vector<8x128xf32>
    %cst_34 = arith.constant 1.000000e-01 : f32
    %96 = vector.broadcast %cst_34 : f32 to vector<8x128xf32>
    %97 = arith.mulf %0, %96 : vector<8x128xf32>
    %cst_35 = arith.constant 1.000000e-01 : f32
    %98 = vector.broadcast %cst_35 : f32 to vector<8x128xf32>
    %99 = arith.mulf %1, %98 : vector<8x128xf32>
    %100 = arith.mulf %97, %97 : vector<8x128xf32>
    %101 = arith.mulf %99, %99 : vector<8x128xf32>
    %cst_36 = arith.constant 2.500000e-01 : f32
    %102 = vector.broadcast %cst_36 : f32 to vector<8x128xf32>
    %103 = arith.addf %102, %100 : vector<8x128xf32>
    %104 = tpu.reciprocal %103 {approx = true} : vector<8x128xf32> -> vector<8x128xf32>
    %105 = arith.mulf %103, %104 : vector<8x128xf32>
    %cst_37 = arith.constant 2.000000e+00 : f32
    %106 = vector.broadcast %cst_37 : f32 to vector<8x128xf32>
    %107 = arith.subf %106, %105 : vector<8x128xf32>
    %108 = arith.mulf %104, %107 : vector<8x128xf32>
    %109 = arith.mulf %103, %108 : vector<8x128xf32>
    %cst_38 = arith.constant 2.000000e+00 : f32
    %110 = vector.broadcast %cst_38 : f32 to vector<8x128xf32>
    %111 = arith.subf %110, %109 : vector<8x128xf32>
    %112 = arith.mulf %108, %111 : vector<8x128xf32>
    %cst_39 = arith.constant 2.500000e-01 : f32
    %113 = vector.broadcast %cst_39 : f32 to vector<8x128xf32>
    %114 = arith.addf %113, %101 : vector<8x128xf32>
    %115 = tpu.reciprocal %114 {approx = true} : vector<8x128xf32> -> vector<8x128xf32>
    %116 = arith.mulf %114, %115 : vector<8x128xf32>
    %cst_40 = arith.constant 2.000000e+00 : f32
    %117 = vector.broadcast %cst_40 : f32 to vector<8x128xf32>
    %118 = arith.subf %117, %116 : vector<8x128xf32>
    %119 = arith.mulf %115, %118 : vector<8x128xf32>
    %120 = arith.mulf %114, %119 : vector<8x128xf32>
    %cst_41 = arith.constant 2.000000e+00 : f32
    %121 = vector.broadcast %cst_41 : f32 to vector<8x128xf32>
    %122 = arith.subf %121, %120 : vector<8x128xf32>
    %123 = arith.mulf %119, %122 : vector<8x128xf32>
    %124 = arith.mulf %100, %112 : vector<8x128xf32>
    %125 = arith.mulf %101, %123 : vector<8x128xf32>
    %cst_42 = arith.constant 2.500000e-01 : f32
    %126 = vector.broadcast %cst_42 : f32 to vector<8x128xf32>
    %127 = arith.mulf %126, %123 : vector<8x128xf32>
    %cst_43 = arith.constant 2.500000e-01 : f32
    %128 = vector.broadcast %cst_43 : f32 to vector<8x128xf32>
    %129 = arith.mulf %128, %112 : vector<8x128xf32>
    %cst_44 = arith.constant 1.000000e+00 : f32
    %130 = vector.broadcast %cst_44 : f32 to vector<8x128xf32>
    %131 = arith.mulf %130, %124 : vector<8x128xf32>
    %cst_45 = arith.constant 2.000000e-01 : f32
    %132 = vector.broadcast %cst_45 : f32 to vector<8x128xf32>
    %133 = arith.mulf %132, %127 : vector<8x128xf32>
    %134 = arith.addf %131, %133 : vector<8x128xf32>
    %cst_46 = arith.constant 1.100000e-01 : f32
    %135 = vector.broadcast %cst_46 : f32 to vector<8x128xf32>
    %136 = arith.mulf %135, %0 : vector<8x128xf32>
    %137 = arith.subf %134, %136 : vector<8x128xf32>
    %138 = arith.mulf %95, %124 : vector<8x128xf32>
    %139 = arith.addf %137, %138 : vector<8x128xf32>
    %cst_47 = arith.constant 1.000000e+01 : f32
    %140 = vector.broadcast %cst_47 : f32 to vector<8x128xf32>
    %141 = arith.mulf %140, %139 : vector<8x128xf32>
    %cst_48 = arith.constant 1.000000e+00 : f32
    %142 = vector.broadcast %cst_48 : f32 to vector<8x128xf32>
    %143 = arith.mulf %142, %125 : vector<8x128xf32>
    %cst_49 = arith.constant 2.000000e-01 : f32
    %144 = vector.broadcast %cst_49 : f32 to vector<8x128xf32>
    %145 = arith.mulf %144, %129 : vector<8x128xf32>
    %146 = arith.addf %143, %145 : vector<8x128xf32>
    %cst_50 = arith.constant 1.100000e-01 : f32
    %147 = vector.broadcast %cst_50 : f32 to vector<8x128xf32>
    %148 = arith.mulf %147, %1 : vector<8x128xf32>
    %149 = arith.subf %146, %148 : vector<8x128xf32>
    %cst_51 = arith.constant 1.000000e+01 : f32
    %150 = vector.broadcast %cst_51 : f32 to vector<8x128xf32>
    %151 = arith.mulf %150, %149 : vector<8x128xf32>
    %c0_52 = arith.constant 0 : index
    %c0_53 = arith.constant 0 : index
    %152 = vector.load %arg4[%c0_52, %c0_53] : memref<8x128xf32, #tpu.memory_space<vmem>>, vector<8x128xf32>
    tpu.vector_store %arg4[%c0_52, %c0_53], %141 {strides = array<i32>} : memref<8x128xf32, #tpu.memory_space<vmem>>, vector<8x128xf32>,
    %c0_54 = arith.constant 0 : index
    %c0_55 = arith.constant 0 : index
    %153 = vector.load %arg5[%c0_54, %c0_55] : memref<8x128xf32, #tpu.memory_space<vmem>>, vector<8x128xf32>
    tpu.vector_store %arg5[%c0_54, %c0_55], %151 {strides = array<i32>} : memref<8x128xf32, #tpu.memory_space<vmem>>, vector<8x128xf32>,
    %cst_56 = arith.constant 0.000000e+00 : f32
    %154 = vector.broadcast %cst_56 : f32 to vector<8x128xf32>
    %155 = arith.subf %154, %141 : vector<8x128xf32>
    %c0_57 = arith.constant 0 : index
    %c0_58 = arith.constant 0 : index
    %156 = vector.load %arg6[%c0_57, %c0_58] : memref<8x128xf32, #tpu.memory_space<vmem>>, vector<8x128xf32>
    tpu.vector_store %arg6[%c0_57, %c0_58], %155 {strides = array<i32>} : memref<8x128xf32, #tpu.memory_space<vmem>>, vector<8x128xf32>,
    %cst_59 = arith.constant 0.000000e+00 : f32
    %157 = vector.broadcast %cst_59 : f32 to vector<8x128xf32>
    %158 = arith.subf %157, %151 : vector<8x128xf32>
    %c0_60 = arith.constant 0 : index
    %c0_61 = arith.constant 0 : index
    %159 = vector.load %arg7[%c0_60, %c0_61] : memref<8x128xf32, #tpu.memory_space<vmem>>, vector<8x128xf32>
    tpu.vector_store %arg7[%c0_60, %c0_61], %158 {strides = array<i32>} : memref<8x128xf32, #tpu.memory_space<vmem>>, vector<8x128xf32>,
    return
  }
}

</mosaic_0001>

<llo_original>
// kernel: tpu_custom_call.1
$region0: #{tpu_custom_call.1}
  #allocation0 [shape = 'u32[]', space=smem, size = 0x4, offset = 0x4, fixed_abs, tag = 'smem constant byte address 0x4 - core index']
  #allocation1 [shape = 'u32[144,128]{1,0:T(1,128)}', space=vmem, size = 0x12000, scoped, tag = 'internal scratch']
  %s0 = inlined_call_operand.hbm [shape: f32[8,128], index: 0, kind: input, shape index: {}]
  %s1 = inlined_call_operand.hbm [shape: f32[8,128], index: 1, kind: input, shape index: {}]
  %s2 = inlined_call_operand.hbm [shape: f32[8,128], index: 2, kind: input, shape index: {}]
  %s3 = inlined_call_operand.vmem [shape: f32[8,128], index: 3, kind: input, shape index: {}]
  %s4 = inlined_call_operand.hbm [shape: f32[8,128], index: 4, kind: output, shape index: {0}]
  %s5 = inlined_call_operand.hbm [shape: f32[8,128], index: 5, kind: output, shape index: {1}]
  %s6 = inlined_call_operand.hbm [shape: f32[8,128], index: 6, kind: output, shape index: {2}]
  %s7 = inlined_call_operand.hbm [shape: f32[8,128], index: 7, kind: output, shape index: {3}]
  %8 = xla_tuple %s4, %s5, %s6, %s7
  %s9 = sld [smem:[#allocation0]]
  $region62: #{tpu_custom_call.1} parent=0
    _
  %s11 = ssub.s32 1, %s9
  %s12 = scalar_select 0, %s11, %s9
  $region1: #{tpu_custom_call.1} parent=0
    #allocation2 [shape = 'u8[4096]{0}', space=vmem, size = 0x1000, scoped, tag = 'input window, operand 0, single buffered']
    #allocation3 [shape = 's32[1]{0}', space=sflag, size = 0x4, scoped, tag = 'scoped memory for tpu_custom_call.1']
    #allocation4 [shape = 's32[1]{0}', space=sflag, size = 0x4, scoped, tag = 'scoped memory for tpu_custom_call.1']
    #allocation5 [shape = 'u8[4096]{0}', space=vmem, size = 0x1000, scoped, tag = 'input window, operand 1, single buffered']
    #allocation6 [shape = 's32[1]{0}', space=sflag, size = 0x4, scoped, tag = 'scoped memory for tpu_custom_call.1']
    #allocation7 [shape = 'u8[4096]{0}', space=vmem, size = 0x1000, scoped, tag = 'input window, operand 2, single buffered']
    #allocation8 [shape = 'u8[4096]{0}', space=vmem, size = 0x1000, scoped, tag = 'output window, operand 0, single buffered']
    #allocation9 [shape = 'u8[4096]{0}', space=vmem, size = 0x1000, scoped, tag = 'output window, operand 1, single buffered']
    #allocation10 [shape = 's32[1]{0}', space=sflag, size = 0x4, scoped, tag = 'scoped memory for tpu_custom_call.1']
    #allocation11 [shape = 'u8[4096]{0}', space=vmem, size = 0x1000, scoped, tag = 'output window, operand 2, single buffered']
    #allocation12 [shape = 'u8[4096]{0}', space=vmem, size = 0x1000, scoped, tag = 'output window, operand 3, single buffered']
    #allocation13 [shape = 's32[1]{0}', space=sflag, size = 0x4, scoped, tag = 'scoped memory for tpu_custom_call.1']
    %13 = vsyncpa [#allocation3], 0
    %14 = vsyncpa [#allocation6], 0
    %15 = vsyncpa [#allocation4], 0
    %16 = vsyncpa [#allocation10], 0
    %17 = vsyncpa [#allocation13], 0
    // Predicated region
    $region2: #{tpu_custom_call.1} parent=1 // pred_check
      _
    $region3: #{tpu_custom_call.1} parent=1 // pred_check_branch
      %19 = sbr.rel (0) target = $region5
    $region4: #{tpu_custom_call.1} parent=1 // pred_region
      %s21 = ssub.s32 128, 128
      %22 = vsyncadd [#allocation3], %s21
      %s24 = sshll.u32 [#allocation2], 4
      %s25 = int_to_ptr.vmem [resolvable:$true] %s24
      %27 = dma.hbm_to_vmem [thread:$0]  %s0, 128, %s25, [#allocation3]
    $region5: #{tpu_custom_call.1} parent=1 // pred_fallthru
      _
    // Predicated region
    $region6: #{tpu_custom_call.1} parent=1 // pred_check
      _
    $region7: #{tpu_custom_call.1} parent=1 // pred_check_branch
      %29 = sbr.rel (0) target = $region9
    $region8: #{tpu_custom_call.1} parent=1 // pred_region
      %s31 = ssub.s32 128, 128
      %32 = vsyncadd [#allocation6], %s31
      %s34 = sshll.u32 [#allocation5], 4
      %s35 = int_to_ptr.vmem [resolvable:$true] %s34
      %37 = dma.hbm_to_vmem [thread:$0]  %s1, 128, %s35, [#allocation6]
    $region9: #{tpu_custom_call.1} parent=1 // pred_fallthru
      _
    // Predicated region
    $region10: #{tpu_custom_call.1} parent=1 // pred_check
      _
    $region11: #{tpu_custom_call.1} parent=1 // pred_check_branch
      %39 = sbr.rel (0) target = $region13
    $region12: #{tpu_custom_call.1} parent=1 // pred_region
      %s41 = ssub.s32 128, 128
      %42 = vsyncadd [#allocation6], %s41
      %s44 = sshll.u32 [#allocation7], 4
      %s45 = int_to_ptr.vmem [resolvable:$true] %s44
      %47 = dma.hbm_to_vmem [thread:$0]  %s2, 128, %s45, [#allocation6]
    $region13: #{tpu_custom_call.1} parent=1 // pred_fallthru
      _
    // Predicated region
    $region14: #{tpu_custom_call.1} parent=1 // pred_check
      _
    $region15: #{tpu_custom_call.1} parent=1 // pred_check_branch
      %49 = sbr.rel (0) target = $region17
    $region16: #{tpu_custom_call.1} parent=1 // pred_region
      _
    $region17: #{tpu_custom_call.1} parent=1 // pred_fallthru
      _
    // Predicated region
    $region18: #{tpu_custom_call.1} parent=1 // pred_check
      _
    $region19: #{tpu_custom_call.1} parent=1 // pred_check_branch
      %51 = sbr.rel (0) target = $region21
    $region20: #{tpu_custom_call.1} parent=1 // pred_region
      %52 = dma.done [#allocation3], 128
    $region21: #{tpu_custom_call.1} parent=1 // pred_fallthru
      _
    // Predicated region
    $region22: #{tpu_custom_call.1} parent=1 // pred_check
      _
    $region23: #{tpu_custom_call.1} parent=1 // pred_check_branch
      %54 = sbr.rel (0) target = $region25
    $region24: #{tpu_custom_call.1} parent=1 // pred_region
      %55 = dma.done [#allocation6], 128
    $region25: #{tpu_custom_call.1} parent=1 // pred_fallthru
      _
    // Predicated region
    $region26: #{tpu_custom_call.1} parent=1 // pred_check
      _
    $region27: #{tpu_custom_call.1} parent=1 // pred_check_branch
      %57 = sbr.rel (0) target = $region29
    $region28: #{tpu_custom_call.1} parent=1 // pred_region
      %58 = dma.done [#allocation6], 128
    $region29: #{tpu_custom_call.1} parent=1 // pred_fallthru
      _
    %v59 = vld [vmem:[#allocation2] sm:$0xff]
    %v60 = vld [vmem:[#allocation5] sm:$0xff]
    %v61 = vld [vmem:[#allocation7] sm:$0xff]
    %v62 = vld [vmem:[%s3] sm:$0xff]
    %v63 = vadd.f32 %v59, %v61
    %v64 = vadd.f32 %v60, %v62
    %v65 = vmul.f32 %v63, 0.1
    %v66 = vmul.f32 %v64, 0.1
    %v67 = vmul.f32 %v65, %v65
    %v68 = vmul.f32 %v66, %v66
    %v69 = vadd.f32 %v67, 0.25
    %v70 = vrcp.pop %v69
    %v71 = vmul.f32 %v69, %v70
    %v72 = vsub.f32 2.0, %v71
    %v73 = vmul.f32 %v70, %v72
    %v74 = vmul.f32 %v69, %v73
    %v75 = vsub.f32 2.0, %v74
    %v76 = vmul.f32 %v73, %v75
    %v77 = vadd.f32 %v68, 0.25
    %v78 = vrcp.pop %v77
    %v79 = vmul.f32 %v77, %v78
    %v80 = vsub.f32 2.0, %v79
    %v81 = vmul.f32 %v78, %v80
    %v82 = vmul.f32 %v77, %v81
    %v83 = vsub.f32 2.0, %v82
    %v84 = vmul.f32 %v81, %v83
    %v85 = vmul.f32 %v67, %v76
    %v86 = vmul.f32 %v68, %v84
    %v87 = vmul.f32 %v84, 0.25
    %v88 = vmul.f32 %v76, 0.25
    %v89 = vmul.f32 %v87, 0.2
    %v90 = vadd.f32 %v85, %v89
    %v91 = vmul.f32 %v63, 0.11
    %v92 = vsub.f32 %v90, %v91
    %v93 = vmul.f32 %v88, 0.2
    %v94 = vadd.f32 %v86, %v93
    %v95 = vmul.f32 %v64, 0.11
    %v96 = vsub.f32 %v94, %v95
    %v97 = vsub.f32 %v63, 6.256206
    %v98 = vsub.f32 %v64, 6.256206
    %v99 = vmul.f32 %v97, 10.0
    %v100 = vmul.f32 %v99, %v85
    %v101 = vsub.f32 0.0, %v99
    %v102 = vmul.f32 %v101, %v92
    %v103 = vmul.f32 %v98, 10.0
    %v104 = vmul.f32 %v103, %v96
    %v105 = vsub.f32 %v102, %v104
    %v106 = vmul.f32 %v97, %v97
    %v107 = vmul.f32 %v98, %v98
    %v108 = vadd.f32 %v106, %v107
    %v109 = vmul.f32 %v108, 0.5
    %v110 = vsub.f32 %v105, %v109
    %v111 = vmul.f32 %v100, %v100
    %v112 = vadd.f32 %v111, 0.025
    %vm113 = vcmp.lt.f32.partialorder %v110, 0.0
    %v114 = vmul.f32 %v110, %v100
    %v115 = vsel %vm113, %v114, 0.0
    %v116 = vrcp.pop %v112
    %v117 = vmul.f32 %v112, %v116
    %v118 = vsub.f32 2.0, %v117
    %v119 = vmul.f32 %v116, %v118
    %v120 = vmul.f32 %v112, %v119
    %v121 = vsub.f32 2.0, %v120
    %v122 = vmul.f32 %v119, %v121
    %v123 = vmul.f32 %v115, %v122
    %v124 = vmul.f32 %v59, 0.1
    %v125 = vmul.f32 %v60, 0.1
    %v126 = vmul.f32 %v124, %v124
    %v127 = vmul.f32 %v125, %v125
    %v128 = vadd.f32 %v126, 0.25
    %v129 = vrcp.pop %v128
    %v130 = vmul.f32 %v128, %v129
    %v131 = vsub.f32 2.0, %v130
    %v132 = vmul.f32 %v129, %v131
    %v133 = vmul.f32 %v128, %v132
    %v134 = vsub.f32 2.0, %v133
    %v135 = vmul.f32 %v132, %v134
    %v136 = vadd.f32 %v127, 0.25
    %v137 = vrcp.pop %v136
    %v138 = vmul.f32 %v136, %v137
    %v139 = vsub.f32 2.0, %v138
    %v140 = vmul.f32 %v137, %v139
    %v141 = vmul.f32 %v136, %v140
    %v142 = vsub.f32 2.0, %v141
    %v143 = vmul.f32 %v140, %v142
    %v144 = vmul.f32 %v126, %v135
    %v145 = vmul.f32 %v127, %v143
    %v146 = vmul.f32 %v143, 0.25
    %v147 = vmul.f32 %v135, 0.25
    %v148 = vmul.f32 %v146, 0.2
    %v149 = vadd.f32 %v144, %v148
    %v150 = vmul.f32 %v59, 0.11
    %v151 = vsub.f32 %v149, %v150
    %v152 = vmul.f32 %v123, %v144
    %v153 = vadd.f32 %v151, %v152
    %v154 = vmul.f32 %v153, 10.0
    %v155 = vmul.f32 %v147, 0.2
    %v156 = vadd.f32 %v145, %v155
    %v157 = vmul.f32 %v60, 0.11
    %v158 = vsub.f32 %v156, %v157
    %v159 = vmul.f32 %v158, 10.0
    %160 = vst [vmem:[#allocation8] sm:$0xff] %v154
    %161 = vst [vmem:[#allocation9] sm:$0xff] %v159
    %v162 = vsub.f32 0.0, %v154
    %163 = vst [vmem:[#allocation11] sm:$0xff] %v162
    %v164 = vsub.f32 0.0, %v159
    %165 = vst [vmem:[#allocation12] sm:$0xff] %v164
    // Predicated region
    $region30: #{tpu_custom_call.1} parent=1 // pred_check
      _
    $region31: #{tpu_custom_call.1} parent=1 // pred_check_branch
      %167 = sbr.rel (0) target = $region33
    $region32: #{tpu_custom_call.1} parent=1 // pred_region
      %s169 = ssub.s32 128, 128
      %170 = vsyncadd [#allocation4], %s169
      %s172 = sshll.u32 [#allocation8], 4
      %s173 = int_to_ptr.vmem [resolvable:$true] %s172
      %175 = dma.vmem_to_hbm [thread:$0]  %s173, 128, %s4, [#allocation4]
    $region33: #{tpu_custom_call.1} parent=1 // pred_fallthru
      _
    // Predicated region
    $region34: #{tpu_custom_call.1} parent=1 // pred_check
      _
    $region35: #{tpu_custom_call.1} parent=1 // pred_check_branch
      %177 = sbr.rel (0) target = $region37
    $region36: #{tpu_custom_call.1} parent=1 // pred_region
      %s179 = ssub.s32 128, 128
      %180 = vsyncadd [#allocation10], %s179
      %s182 = sshll.u32 [#allocation9], 4
      %s183 = int_to_ptr.vmem [resolvable:$true] %s182
      %185 = dma.vmem_to_hbm [thread:$0]  %s183, 128, %s5, [#allocation10]
    $region37: #{tpu_custom_call.1} parent=1 // pred_fallthru
      _
    // Predicated region
    $region38: #{tpu_custom_call.1} parent=1 // pred_check
      _
    $region39: #{tpu_custom_call.1} parent=1 // pred_check_branch
      %187 = sbr.rel (0) target = $region41
    $region40: #{tpu_custom_call.1} parent=1 // pred_region
      %s189 = ssub.s32 128, 128
      %190 = vsyncadd [#allocation10], %s189
      %s192 = sshll.u32 [#allocation11], 4
      %s193 = int_to_ptr.vmem [resolvable:$true] %s192
      %195 = dma.vmem_to_hbm [thread:$0]  %s193, 128, %s6, [#allocation10]
    $region41: #{tpu_custom_call.1} parent=1 // pred_fallthru
      _
    // Predicated region
    $region42: #{tpu_custom_call.1} parent=1 // pred_check
      _
    $region43: #{tpu_custom_call.1} parent=1 // pred_check_branch
      %197 = sbr.rel (0) target = $region45
    $region44: #{tpu_custom_call.1} parent=1 // pred_region
      %s199 = ssub.s32 128, 128
      %200 = vsyncadd [#allocation13], %s199
      %s202 = sshll.u32 [#allocation12], 4
      %s203 = int_to_ptr.vmem [resolvable:$true] %s202
      %205 = dma.vmem_to_hbm [thread:$0]  %s203, 128, %s7, [#allocation13]
    $region45: #{tpu_custom_call.1} parent=1 // pred_fallthru
      _
    // Predicated region
    $region46: #{tpu_custom_call.1} parent=1 // pred_check
      _
    $region47: #{tpu_custom_call.1} parent=1 // pred_check_branch
      %207 = sbr.rel (0) target = $region49
    $region48: #{tpu_custom_call.1} parent=1 // pred_region
      %208 = dma.done [#allocation4], 128
    $region49: #{tpu_custom_call.1} parent=1 // pred_fallthru
      _
    // Predicated region
    $region50: #{tpu_custom_call.1} parent=1 // pred_check
      _
    $region51: #{tpu_custom_call.1} parent=1 // pred_check_branch
      %210 = sbr.rel (0) target = $region53
    $region52: #{tpu_custom_call.1} parent=1 // pred_region
      %211 = dma.done [#allocation10], 128
    $region53: #{tpu_custom_call.1} parent=1 // pred_fallthru
      _
    // Predicated region
    $region54: #{tpu_custom_call.1} parent=1 // pred_check
      _
    $region55: #{tpu_custom_call.1} parent=1 // pred_check_branch
      %213 = sbr.rel (0) target = $region57
    $region56: #{tpu_custom_call.1} parent=1 // pred_region
      %214 = dma.done [#allocation10], 128
    $region57: #{tpu_custom_call.1} parent=1 // pred_fallthru
      _
    // Predicated region
    $region58: #{tpu_custom_call.1} parent=1 // pred_check
      _
    $region59: #{tpu_custom_call.1} parent=1 // pred_check_branch
      %216 = sbr.rel (0) target = $region61
    $region60: #{tpu_custom_call.1} parent=1 // pred_region
      %217 = dma.done [#allocation13], 128
    $region61: #{tpu_custom_call.1} parent=1 // pred_fallthru
      _
    %218 = vsyncpa [#allocation3], 1
    %219 = vsyncpa [#allocation6], 1
    %220 = vsyncpa [#allocation4], 1
    %221 = vsyncpa [#allocation10], 1
    %222 = vsyncpa [#allocation13], 1

</llo_original>
